<compile_context>
chip_gen: v7x
topology: tpu7x:2x2x1
jax: 0.10.0
libtpu: 0.0.40
codegen_flags: <defaults>
</compile_context>

<pallas_src>
import jax
import jax.numpy as jnp
from jax.experimental import pallas as pl
from jax.experimental.pallas import tpu as pltpu


def _round_up(n, m):
    return (n + m - 1) // m * m


def mlp_kernel(xT_ref, w1_ref, b1_ref, w2_ref, b2_ref, w3p_ref, b3_ref, o_ref):
    xT = xT_ref[...]                                        # (2, TILE_B), batch on lanes

    # ---- Layer 1: Linear(2, 16) + ReLU ------------------------------------
    # K=2 dot goes to the MXU (its slot is idle); bias add / relu on the VPU.
    h1 = jnp.dot(w1_ref[...], xT, preferred_element_type=jnp.float32)   # (16, TILE_B)
    h1 = jnp.maximum(h1 + b1_ref[...], 0.0)

    # ---- Layer 2: Linear(16, 16) + ReLU (MXU) -----------------------------
    h2 = jnp.dot(w2_ref[...], h1, preferred_element_type=jnp.float32)   # (16, TILE_B)
    h2 = jnp.maximum(h2 + b2_ref[...], 0.0)

    # ---- Layer 3: Linear(16, 1) (MXU, w3 zero-padded to (8,16)) -----------
    l8 = jnp.dot(w3p_ref[...], h2, preferred_element_type=jnp.float32)  # (8, TILE_B)
    logits = l8[0:1, :] + b3_ref[...]                                   # (1, TILE_B)

    # ---- Sigmoid: single EUP tanh, numerically safe -----------------------
    o_ref[...] = 0.5 * (1.0 + jnp.tanh(0.5 * logits))


def mlp_forward_feature_major(xT, params, tile_b=32768):
    """Zero-relayout entry point.

    xT: (2, B_pad) float32, feature-major, B_pad a multiple of 128.
    Returns (1, B_pad) float32 sigmoid probabilities.
    """
    _, B_pad = xT.shape
    assert B_pad % 128 == 0, "feature-major batch width must be a multiple of 128"

    tb = min(int(tile_b), B_pad)        # both are multiples of 128
    num_tiles = pl.cdiv(B_pad, tb)      # ragged last block handled by Pallas masking

    w1, b1 = params["w1"], params["b1"]      # (16, 2),  (16, 1)
    w2, b2 = params["w2"], params["b2"]      # (16, 16), (16, 1)
    w3p, b3 = params["w3p"], params["b3"]    # (8, 16) zero-padded, (1, 1)

    # Weights/biases: full-array blocks with constant index_map -> DMA'd into
    # VMEM once and reused across all batch tiles.
    const_spec = lambda a: pl.BlockSpec(a.shape, lambda i: (0, 0))

    return pl.pallas_call(
        mlp_kernel,
        out_shape=jax.ShapeDtypeStruct((1, B_pad), jnp.float32),
        grid=(num_tiles,),
        in_specs=[
            pl.BlockSpec((2, tb), lambda i: (0, i)),    # x^T batch tiles (lane-dense)
            const_spec(w1), const_spec(b1),
            const_spec(w2), const_spec(b2),
            const_spec(w3p), const_spec(b3),
        ],
        out_specs=pl.BlockSpec((1, tb), lambda i: (0, i)),  # lane-dense output
        compiler_params=pltpu.CompilerParams(
            dimension_semantics=("parallel",),
            vmem_limit_bytes=32 * 1024 * 1024,   # safe on v5e/v6e/v7x; lifts v5e's 16 MiB default
        ),
    )(xT, w1, b1, w2, b2, w3p, b3)


def mlp_forward(x, params, tile_b=32768):
    """Row-major adapter matching the torch module: x (B, 2) -> (B, 1)."""
    B = x.shape[0]
    B_pad = _round_up(B, 128)           # pad only to lane width, not to a tile multiple
    xT = jnp.transpose(x)               # (2, B); for large B prefer the feature-major API
    if B_pad != B:
        xT = jnp.pad(xT, ((0, 0), (0, B_pad - B)))
    out = mlp_forward_feature_major(xT, params, tile_b=tile_b)
    return out[0, :B].reshape(B, 1)


def init_params(key):
    """Deterministic init mimicking torch.nn.Linear defaults
    (uniform(-1/sqrt(fan_in), 1/sqrt(fan_in)) for both weight and bias)."""
    def linear(k, fan_in, fan_out):
        kw, kb = jax.random.split(k)
        bound = 1.0 / jnp.sqrt(float(fan_in))
        w = jax.random.uniform(kw, (fan_out, fan_in), jnp.float32, -bound, bound)
        b = jax.random.uniform(kb, (fan_out, 1), jnp.float32, -bound, bound)
        return w, b

    k1, k2, k3 = jax.random.split(key, 3)
    w1, b1 = linear(k1, 2, 16)               # (16, 2),  (16, 1)
    w2, b2 = linear(k2, 16, 16)              # (16, 16), (16, 1)
    w3, b3 = linear(k3, 16, 1)               # (1, 16),  (1, 1)
    w3p = jnp.zeros((8, 16), jnp.float32).at[0:1, :].set(w3)   # pad to 8 sublanes for MXU
    return {"w1": w1, "b1": b1,
            "w2": w2, "b2": b2,
            "w3p": w3p, "b3": b3}


def _reference(x, params):
    """Pure-JAX forward with torch semantics: x @ W.T + b per layer, sigmoid."""
    W1, B1 = params["w1"], params["b1"]
    W2, B2 = params["w2"], params["b2"]
    W3, B3 = params["w3p"][0:1, :], params["b3"]          # (1, 16), (1, 1)
    h1 = jnp.maximum(x @ W1.T + B1.T, 0.0)
    h2 = jnp.maximum(h1 @ W2.T + B2.T, 0.0)
    return jax.nn.sigmoid(h2 @ W3.T + B3)


if __name__ == "__main__":
    key = jax.random.PRNGKey(0)
    kx, kx2, kp = jax.random.split(key, 3)
    params = init_params(kp)

    # Small primary test: B=8 (single 128-wide tile).
    B = 8
    x = jax.random.normal(kx, (B, 2), dtype=jnp.float32)
    out = jax.block_until_ready(mlp_forward(x, params))
    ref = _reference(x, params)
    assert out.shape == (B, 1)
    assert jnp.allclose(out, ref, atol=1e-4, rtol=1e-4), (out, ref)

    # Second test: exercises lane-pad (300 -> 384) and a ragged final grid
    # block (tile of 256 over 384 columns -> cdiv grid with masked tail).
    B2 = 300
    x2 = jax.random.normal(kx2, (B2, 2), dtype=jnp.float32)
    out2 = jax.block_until_ready(mlp_forward(x2, params, tile_b=256))
    ref2 = _reference(x2, params)
    assert out2.shape == (B2, 1)
    assert jnp.allclose(out2, ref2, atol=1e-4, rtol=1e-4), (out2, ref2)

    print("KERNEL_OK")
</pallas_src>

<mosaic_0001>
module attributes {stable_mosaic.version = 11 : i64} {
  func.func @mlp_kernel(%arg0: i32, %arg1: memref<2x128xf32, #tpu.memory_space<vmem>>, %arg2: memref<16x2xf32, #tpu.memory_space<vmem>>, %arg3: memref<16x1xf32, #tpu.memory_space<vmem>>, %arg4: memref<16x16xf32, #tpu.memory_space<vmem>>, %arg5: memref<16x1xf32, #tpu.memory_space<vmem>>, %arg6: memref<8x16xf32, #tpu.memory_space<vmem>>, %arg7: memref<1x1xf32, #tpu.memory_space<vmem>>, %arg8: memref<1x128xf32, #tpu.memory_space<vmem>>) attributes {dimension_semantics = [#tpu.dimension_semantics<parallel>], iteration_bounds = array<i64: 1>, scalar_prefetch = 0 : i64, scratch_operands = 0 : i64, tpu.core_type = #tpu.core_type<tc>, window_params = [{transform_indices = @transform_0, window_bounds = array<i64: 2, 128>}, {pipeline_mode = #tpu.pipeline_mode<synchronous>, transform_indices = @transform_1, window_bounds = array<i64: 16, 2>}, {pipeline_mode = #tpu.pipeline_mode<synchronous>, transform_indices = @transform_2, window_bounds = array<i64: 16, 1>}, {pipeline_mode = #tpu.pipeline_mode<synchronous>, transform_indices = @transform_3, window_bounds = array<i64: 16, 16>}, {pipeline_mode = #tpu.pipeline_mode<synchronous>, transform_indices = @transform_4, window_bounds = array<i64: 16, 1>}, {pipeline_mode = #tpu.pipeline_mode<synchronous>, transform_indices = @transform_5, window_bounds = array<i64: 8, 16>}, {pipeline_mode = #tpu.pipeline_mode<synchronous>, transform_indices = @transform_6, window_bounds = array<i64: 1, 1>}, {transform_indices = @transform_7, window_bounds = array<i64: 1, 128>}]} {
    %c0 = arith.constant 0 : index
    %c0_0 = arith.constant 0 : index
    %0 = vector.load %arg1[%c0, %c0_0] : memref<2x128xf32, #tpu.memory_space<vmem>>, vector<2x128xf32>
    %c0_1 = arith.constant 0 : index
    %c0_2 = arith.constant 0 : index
    %1 = vector.load %arg2[%c0_1, %c0_2] : memref<16x2xf32, #tpu.memory_space<vmem>>, vector<16x2xf32>
    %cst = arith.constant dense<0.000000e+00> : vector<16x128xf32>
    %2 = tpu.matmul %1, %0, %cst {dimension_numbers = #tpu.dot_dimension_numbers<[1], [0], [0], [1], [0, 0, 1, 1], [], []>} : vector<16x2xf32>, vector<2x128xf32>, vector<16x128xf32> -> vector<16x128xf32>
    %c0_3 = arith.constant 0 : index
    %c0_4 = arith.constant 0 : index
    %3 = vector.load %arg3[%c0_3, %c0_4] : memref<16x1xf32, #tpu.memory_space<vmem>>, vector<16x1xf32>
    %4 = vector.broadcast %3 : vector<16x1xf32> to vector<16x128xf32>
    %5 = arith.addf %2, %4 : vector<16x128xf32>
    %cst_5 = arith.constant 0.000000e+00 : f32
    %6 = vector.broadcast %cst_5 : f32 to vector<16x128xf32>
    %7 = arith.maximumf %5, %6 : vector<16x128xf32>
    %c0_6 = arith.constant 0 : index
    %c0_7 = arith.constant 0 : index
    %8 = vector.load %arg4[%c0_6, %c0_7] : memref<16x16xf32, #tpu.memory_space<vmem>>, vector<16x16xf32>
    %cst_8 = arith.constant dense<0.000000e+00> : vector<16x128xf32>
    %9 = tpu.matmul %8, %7, %cst_8 {dimension_numbers = #tpu.dot_dimension_numbers<[1], [0], [0], [1], [0, 0, 1, 1], [], []>} : vector<16x16xf32>, vector<16x128xf32>, vector<16x128xf32> -> vector<16x128xf32>
    %c0_9 = arith.constant 0 : index
    %c0_10 = arith.constant 0 : index
    %10 = vector.load %arg5[%c0_9, %c0_10] : memref<16x1xf32, #tpu.memory_space<vmem>>, vector<16x1xf32>
    %11 = vector.broadcast %10 : vector<16x1xf32> to vector<16x128xf32>
    %12 = arith.addf %9, %11 : vector<16x128xf32>
    %cst_11 = arith.constant 0.000000e+00 : f32
    %13 = vector.broadcast %cst_11 : f32 to vector<16x128xf32>
    %14 = arith.maximumf %12, %13 : vector<16x128xf32>
    %c0_12 = arith.constant 0 : index
    %c0_13 = arith.constant 0 : index
    %15 = vector.load %arg6[%c0_12, %c0_13] : memref<8x16xf32, #tpu.memory_space<vmem>>, vector<8x16xf32>
    %cst_14 = arith.constant dense<0.000000e+00> : vector<8x128xf32>
    %16 = tpu.matmul %15, %14, %cst_14 {dimension_numbers = #tpu.dot_dimension_numbers<[1], [0], [0], [1], [0, 0, 1, 1], [], []>} : vector<8x16xf32>, vector<16x128xf32>, vector<8x128xf32> -> vector<8x128xf32>
    %17 = vector.extract_strided_slice %16 {offsets = [0, 0], sizes = [1, 128], strides = [1, 1]} : vector<8x128xf32> to vector<1x128xf32>
    %c0_15 = arith.constant 0 : index
    %c0_16 = arith.constant 0 : index
    %18 = vector.load %arg7[%c0_15, %c0_16] : memref<1x1xf32, #tpu.memory_space<vmem>>, vector<1x1xf32>
    %19 = vector.broadcast %18 : vector<1x1xf32> to vector<1x128xf32>
    %20 = arith.addf %17, %19 : vector<1x128xf32>
    %cst_17 = arith.constant 5.000000e-01 : f32
    %21 = vector.broadcast %cst_17 : f32 to vector<1x128xf32>
    %22 = arith.mulf %21, %20 : vector<1x128xf32>
    %23 = math.tanh %22 : vector<1x128xf32>
    %cst_18 = arith.constant 1.000000e+00 : f32
    %24 = vector.broadcast %cst_18 : f32 to vector<1x128xf32>
    %25 = arith.addf %24, %23 : vector<1x128xf32>
    %cst_19 = arith.constant 5.000000e-01 : f32
    %26 = vector.broadcast %cst_19 : f32 to vector<1x128xf32>
    %27 = arith.mulf %26, %25 : vector<1x128xf32>
    %c0_20 = arith.constant 0 : index
    %c0_21 = arith.constant 0 : index
    %28 = vector.load %arg8[%c0_20, %c0_21] : memref<1x128xf32, #tpu.memory_space<vmem>>, vector<1x128xf32>
    tpu.vector_store %arg8[%c0_20, %c0_21], %27 {strides = array<i32>} : memref<1x128xf32, #tpu.memory_space<vmem>>, vector<1x128xf32>,
    return
  }
  func.func @transform_0(%arg0: i32) -> (i32, i32) {
    %c0_i32 = arith.constant 0 : i32
    %c0_i32_0 = arith.constant 0 : i32
    return %c0_i32, %arg0 : i32, i32
  }
  func.func @transform_1(%arg0: i32) -> (i32, i32) {
    %c0_i32 = arith.constant 0 : i32
    %c0_i32_0 = arith.constant 0 : i32
    %c0_i32_1 = arith.constant 0 : i32
    return %c0_i32, %c0_i32_0 : i32, i32
  }
  func.func @transform_2(%arg0: i32) -> (i32, i32) {
    %c0_i32 = arith.constant 0 : i32
    %c0_i32_0 = arith.constant 0 : i32
    %c0_i32_1 = arith.constant 0 : i32
    return %c0_i32, %c0_i32_0 : i32, i32
  }
  func.func @transform_3(%arg0: i32) -> (i32, i32) {
    %c0_i32 = arith.constant 0 : i32
    %c0_i32_0 = arith.constant 0 : i32
    %c0_i32_1 = arith.constant 0 : i32
    return %c0_i32, %c0_i32_0 : i32, i32
  }
  func.func @transform_4(%arg0: i32) -> (i32, i32) {
    %c0_i32 = arith.constant 0 : i32
    %c0_i32_0 = arith.constant 0 : i32
    %c0_i32_1 = arith.constant 0 : i32
    return %c0_i32, %c0_i32_0 : i32, i32
  }
  func.func @transform_5(%arg0: i32) -> (i32, i32) {
    %c0_i32 = arith.constant 0 : i32
    %c0_i32_0 = arith.constant 0 : i32
    %c0_i32_1 = arith.constant 0 : i32
    return %c0_i32, %c0_i32_0 : i32, i32
  }
  func.func @transform_6(%arg0: i32) -> (i32, i32) {
    %c0_i32 = arith.constant 0 : i32
    %c0_i32_0 = arith.constant 0 : i32
    %c0_i32_1 = arith.constant 0 : i32
    return %c0_i32, %c0_i32_0 : i32, i32
  }
  func.func @transform_7(%arg0: i32) -> (i32, i32) {
    %c0_i32 = arith.constant 0 : i32
    %c0_i32_0 = arith.constant 0 : i32
    return %c0_i32, %arg0 : i32, i32
  }
}

</mosaic_0001>

<llo_original>
// kernel: tpu_custom_call.1
$region0: #{tpu_custom_call.1}
  #allocation0 [shape = 'u32[]', space=smem, size = 0x4, offset = 0x4, fixed_abs, tag = 'smem constant byte address 0x4 - core index']
  #allocation1 [shape = 'u32[144,128]{1,0:T(1,128)}', space=vmem, size = 0x12000, scoped, tag = 'internal scratch']
  #allocation2 [shape = 'f32[1,1]{1,0:T(1,128)S(1)}', space=vmem, size = 0x200, scoped, tag = 'scoped memory for tpu_custom_call.1']
  %s0 = inlined_call_operand.vmem [shape: f32[2,128], index: 0, kind: input, shape index: {}]
  %s1 = inlined_call_operand.vmem [shape: f32[16,2], index: 1, kind: input, shape index: {}]
  %s2 = inlined_call_operand.vmem [shape: f32[16,1], index: 2, kind: input, shape index: {}]
  %s3 = inlined_call_operand.vmem [shape: f32[16,16], index: 3, kind: input, shape index: {}]
  %s4 = inlined_call_operand.vmem [shape: f32[16,1], index: 4, kind: input, shape index: {}]
  %s5 = inlined_call_operand.vmem [shape: f32[8,16], index: 5, kind: input, shape index: {}]
  %s6 = inlined_call_operand.<no memory space> [shape: f32[1,1], index: 6, kind: input, shape index: {}]
  %s7 = inlined_call_operand.hbm [shape: f32[1,128], index: 7, kind: output, shape index: {}]
  %s8 = sld [smem:[#allocation0]]
  $region38: #{tpu_custom_call.1} parent=0
    _
  %s10 = ssub.s32 1, %s8
  %s11 = scalar_select 0, %s10, %s8
  %v12 = vstv %s6
  %13 = vst [vmem:[#allocation2] sm:$0x1] %v12
  $region1: #{tpu_custom_call.1} parent=0
    #allocation3 [shape = 'u8[512]{0}', space=vmem, size = 0x400, scoped, tag = 'output window, operand 0, single buffered']
    #allocation4 [shape = 's32[1]{0}', space=sflag, size = 0x4, scoped, tag = 'scoped memory for tpu_custom_call.1']
    %14 = vsyncpa [#allocation4], 0
    // Predicated region
    $region2: #{tpu_custom_call.1} parent=1 // pred_check
      _
    $region3: #{tpu_custom_call.1} parent=1 // pred_check_branch
      %16 = sbr.rel (0) target = $region5
    $region4: #{tpu_custom_call.1} parent=1 // pred_region
      _
    $region5: #{tpu_custom_call.1} parent=1 // pred_fallthru
      _
    // Predicated region
    $region6: #{tpu_custom_call.1} parent=1 // pred_check
      _
    $region7: #{tpu_custom_call.1} parent=1 // pred_check_branch
      %18 = sbr.rel (0) target = $region9
    $region8: #{tpu_custom_call.1} parent=1 // pred_region
      _
    $region9: #{tpu_custom_call.1} parent=1 // pred_fallthru
      _
    // Predicated region
    $region10: #{tpu_custom_call.1} parent=1 // pred_check
      _
    $region11: #{tpu_custom_call.1} parent=1 // pred_check_branch
      %20 = sbr.rel (0) target = $region13
    $region12: #{tpu_custom_call.1} parent=1 // pred_region
      _
    $region13: #{tpu_custom_call.1} parent=1 // pred_fallthru
      _
    // Predicated region
    $region14: #{tpu_custom_call.1} parent=1 // pred_check
      _
    $region15: #{tpu_custom_call.1} parent=1 // pred_check_branch
      %22 = sbr.rel (0) target = $region17
    $region16: #{tpu_custom_call.1} parent=1 // pred_region
      _
    $region17: #{tpu_custom_call.1} parent=1 // pred_fallthru
      _
    // Predicated region
    $region18: #{tpu_custom_call.1} parent=1 // pred_check
      _
    $region19: #{tpu_custom_call.1} parent=1 // pred_check_branch
      %24 = sbr.rel (0) target = $region21
    $region20: #{tpu_custom_call.1} parent=1 // pred_region
      _
    $region21: #{tpu_custom_call.1} parent=1 // pred_fallthru
      _
    // Predicated region
    $region22: #{tpu_custom_call.1} parent=1 // pred_check
      _
    $region23: #{tpu_custom_call.1} parent=1 // pred_check_branch
      %26 = sbr.rel (0) target = $region25
    $region24: #{tpu_custom_call.1} parent=1 // pred_region
      _
    $region25: #{tpu_custom_call.1} parent=1 // pred_fallthru
      _
    // Predicated region
    $region26: #{tpu_custom_call.1} parent=1 // pred_check
      _
    $region27: #{tpu_custom_call.1} parent=1 // pred_check_branch
      %28 = sbr.rel (0) target = $region29
    $region28: #{tpu_custom_call.1} parent=1 // pred_region
      _
    $region29: #{tpu_custom_call.1} parent=1 // pred_fallthru
      _
    %v29 = vld [vmem:[%s0] sm:$0x3]
    %v30 = vld [vmem:[%s1] sm:$0xff]
    %v31 = vld [vmem:[%s1 + $0x8] sm:$0xff]
    %v32 = vld [vmem:[%s2] sm:$0xff]
    %v33 = vld [vmem:[%s2 + $0x8] sm:$0xff]
    %35 = vset.pattern.permute.xlu0 0
    %36 = vperm.xlu0 %35, %v32
    %v37 = vpop.permute.xlu0 %36
    %40 = vset.pattern.permute.xlu0 0
    %41 = vperm.xlu0 %40, %v33
    %v42 = vpop.permute.xlu0 %41
    %vm44 = vcmask 15360
    %v46 = vsel %vm44, %v30, 0
    %v49 = vsel %vm44, %v31, 0
    %vm51 = vcmask 1041408
    %v53 = vsel %vm51, %v29, 0
    %55 = vmatprep.subr.mxu0 0.0
    %56 = vmatpush1.msra.mxu0 %v53
    %57 = vmatprep.subr.mxu0 0.0
    %58 = vmatpush1.msra.mxu0 0.0
    %59 = vmatprep.subr.mxu0 0.0
    %60 = vmatpush1.msra.mxu0 0.0
    %61 = vmatprep.subr.mxu0 0.0
    %62 = vmatpush1.msra.mxu0 0.0
    %63 = vmatprep.subr.mxu0 0.0
    %64 = vmatpush1.msra.mxu0 0.0
    %65 = vmatprep.subr.mxu0 0.0
    %66 = vmatpush1.msra.mxu0 0.0
    %67 = vmatprep.subr.mxu0 0.0
    %68 = vmatpush1.msra.mxu0 0.0
    %69 = vmatprep.subr.mxu0 0.0
    %70 = vmatpush1.msra.mxu0 0.0
    %71 = vmatprep.subr.mxu0 0.0
    %72 = vmatpush1.msra.mxu0 0.0
    %73 = vmatprep.subr.mxu0 0.0
    %74 = vmatpush1.msra.mxu0 0.0
    %75 = vmatprep.subr.mxu0 0.0
    %76 = vmatpush1.msra.mxu0 0.0
    %77 = vmatprep.subr.mxu0 0.0
    %78 = vmatpush1.msra.mxu0 0.0
    %79 = vmatprep.subr.mxu0 0.0
    %80 = vmatpush1.msra.mxu0 0.0
    %81 = vmatprep.subr.mxu0 0.0
    %82 = vmatpush1.msra.mxu0 0.0
    %83 = vmatprep.subr.mxu0 0.0
    %84 = vmatpush1.msra.mxu0 0.0
    %85 = vmatprep.subr.mxu0 0.0
    %86 = vmatpush1.msra.mxu0 0.0
    %87 = vmatprep.subr.mxu0 0.0
    %88 = vmatpush1.msra.mxu0 0.0
    %89 = vmatprep.subr.mxu0 0.0
    %90 = vmatpush1.msra.mxu0 0.0
    %91 = vmatprep.subr.mxu0 0.0
    %92 = vmatpush1.msra.mxu0 0.0
    %93 = vmatprep.subr.mxu0 0.0
    %94 = vmatpush1.msra.mxu0 0.0
    %95 = vmatprep.subr.mxu0 0.0
    %96 = vmatpush1.msra.mxu0 0.0
    %97 = vmatprep.subr.mxu0 0.0
    %98 = vmatpush1.msra.mxu0 0.0
    %99 = vmatprep.subr.mxu0 0.0
    %100 = vmatpush1.msra.mxu0 0.0
    %101 = vmatprep.subr.mxu0 0.0
    %102 = vmatpush1.msra.mxu0 0.0
    %103 = vmatprep.subr.mxu0 0.0
    %104 = vmatpush1.msra.mxu0 0.0
    %105 = vmatprep.subr.mxu0 0.0
    %106 = vmatpush1.msra.mxu0 0.0
    %107 = vmatprep.subr.mxu0 0.0
    %108 = vmatpush1.msra.mxu0 0.0
    %109 = vmatprep.subr.mxu0 0.0
    %110 = vmatpush1.msra.mxu0 0.0
    %111 = vmatprep.subr.mxu0 0.0
    %112 = vmatpush1.msra.mxu0 0.0
    %113 = vmatprep.subr.mxu0 0.0
    %114 = vmatpush1.msra.mxu0 0.0
    %115 = vmatprep.subr.mxu0 0.0
    %116 = vmatpush1.msra.mxu0 0.0
    %117 = vmatprep.subr.mxu0 0.0
    %118 = vmatpush1.msra.mxu0 0.0
    %119 = vmatprep.mubr.f32.mxu0 0.0
    %120 = vmatmul.mubr.f32.gmra.mrb[0].mxu0 %v46
    %v121 = vpop.f32.mrb[0].mxu0
    %v122 = vadd.f32 %v37, %v121
    %v123 = vpop.f32.mrb[0].mxu0
    %124 = vmatprep.mubr.f32.mxu0 0.0
    %125 = vmatmul.mubr.f32.gmra.mrb[0].mxu0 %v49
    %v126 = vpop.f32.mrb[0].mxu0
    %v127 = vadd.f32 %v42, %v126
    %v128 = vpop.f32.mrb[0].mxu0
    %129 = vdwg.mxu0
    %v130 = vmax.f32 %v122, 0.0
    %v131 = vmax.f32 %v127, 0.0
    %v132 = vld [vmem:[%s3] sm:$0xff]
    %v133 = vld [vmem:[%s3 + $0x8] sm:$0xff]
    %v134 = vld [vmem:[%s4] sm:$0xff]
    %v135 = vld [vmem:[%s4 + $0x8] sm:$0xff]
    %137 = vset.pattern.permute.xlu0 0
    %138 = vperm.xlu0 %137, %v134
    %v139 = vpop.permute.xlu0 %138
    %142 = vset.pattern.permute.xlu0 0
    %143 = vperm.xlu0 %142, %v135
    %v144 = vpop.permute.xlu0 %143
    %vm146 = vcmask 130048
    %v148 = vsel %vm146, %v132, 0
    %v151 = vsel %vm146, %v133, 0
    %153 = vmatprep.subr.mxu0 0.0
    %154 = vmatpush1.msra.mxu0 %v130
    %155 = vmatprep.subr.mxu0 0.0
    %156 = vmatpush1.msra.mxu0 %v131
    %157 = vmatprep.subr.mxu0 0.0
    %158 = vmatpush1.msra.mxu0 0.0
    %159 = vmatprep.subr.mxu0 0.0
    %160 = vmatpush1.msra.mxu0 0.0
    %161 = vmatprep.subr.mxu0 0.0
    %162 = vmatpush1.msra.mxu0 0.0
    %163 = vmatprep.subr.mxu0 0.0
    %164 = vmatpush1.msra.mxu0 0.0
    %165 = vmatprep.subr.mxu0 0.0
    %166 = vmatpush1.msra.mxu0 0.0
    %167 = vmatprep.subr.mxu0 0.0
    %168 = vmatpush1.msra.mxu0 0.0
    %169 = vmatprep.subr.mxu0 0.0
    %170 = vmatpush1.msra.mxu0 0.0
    %171 = vmatprep.subr.mxu0 0.0
    %172 = vmatpush1.msra.mxu0 0.0
    %173 = vmatprep.subr.mxu0 0.0
    %174 = vmatpush1.msra.mxu0 0.0
    %175 = vmatprep.subr.mxu0 0.0
    %176 = vmatpush1.msra.mxu0 0.0
    %177 = vmatprep.subr.mxu0 0.0
    %178 = vmatpush1.msra.mxu0 0.0
    %179 = vmatprep.subr.mxu0 0.0
    %180 = vmatpush1.msra.mxu0 0.0
    %181 = vmatprep.subr.mxu0 0.0
    %182 = vmatpush1.msra.mxu0 0.0
    %183 = vmatprep.subr.mxu0 0.0
    %184 = vmatpush1.msra.mxu0 0.0
    %185 = vmatprep.subr.mxu0 0.0
    %186 = vmatpush1.msra.mxu0 0.0
    %187 = vmatprep.subr.mxu0 0.0
    %188 = vmatpush1.msra.mxu0 0.0
    %189 = vmatprep.subr.mxu0 0.0
    %190 = vmatpush1.msra.mxu0 0.0
    %191 = vmatprep.subr.mxu0 0.0
    %192 = vmatpush1.msra.mxu0 0.0
    %193 = vmatprep.subr.mxu0 0.0
    %194 = vmatpush1.msra.mxu0 0.0
    %195 = vmatprep.subr.mxu0 0.0
    %196 = vmatpush1.msra.mxu0 0.0
    %197 = vmatprep.subr.mxu0 0.0
    %198 = vmatpush1.msra.mxu0 0.0
    %199 = vmatprep.subr.mxu0 0.0
    %200 = vmatpush1.msra.mxu0 0.0
    %201 = vmatprep.subr.mxu0 0.0
    %202 = vmatpush1.msra.mxu0 0.0
    %203 = vmatprep.subr.mxu0 0.0
    %204 = vmatpush1.msra.mxu0 0.0
    %205 = vmatprep.subr.mxu0 0.0
    %206 = vmatpush1.msra.mxu0 0.0
    %207 = vmatprep.subr.mxu0 0.0
    %208 = vmatpush1.msra.mxu0 0.0
    %209 = vmatprep.subr.mxu0 0.0
    %210 = vmatpush1.msra.mxu0 0.0
    %211 = vmatprep.subr.mxu0 0.0
    %212 = vmatpush1.msra.mxu0 0.0
    %213 = vmatprep.subr.mxu0 0.0
    %214 = vmatpush1.msra.mxu0 0.0
    %215 = vmatprep.subr.mxu0 0.0
    %216 = vmatpush1.msra.mxu0 0.0
    %217 = vmatprep.mubr.f32.mxu0 0.0
    %218 = vmatmul.mubr.f32.gmra.mrb[0].mxu0 %v148
    %v219 = vpop.f32.mrb[0].mxu0
    %v220 = vadd.f32 %v139, %v219
    %v221 = vpop.f32.mrb[0].mxu0
    %222 = vmatprep.mubr.f32.mxu0 0.0
    %223 = vmatmul.mubr.f32.gmra.mrb[0].mxu0 %v151
    %v224 = vpop.f32.mrb[0].mxu0
    %v225 = vadd.f32 %v144, %v224
    %v226 = vpop.f32.mrb[0].mxu0
    %227 = vdwg.mxu0
    %v228 = vmax.f32 %v220, 0.0
    %v229 = vmax.f32 %v225, 0.0
    %v230 = vld [vmem:[%s5] sm:$0xff]
    %v232 = vsel %vm146, %v230, 0
    %234 = vmatprep.subr.mxu0 0.0
    %235 = vmatpush1.msra.mxu0 %v228
    %236 = vmatprep.subr.mxu0 0.0
    %237 = vmatpush1.msra.mxu0 %v229
    %238 = vmatprep.subr.mxu0 0.0
    %239 = vmatpush1.msra.mxu0 0.0
    %240 = vmatprep.subr.mxu0 0.0
    %241 = vmatpush1.msra.mxu0 0.0
    %242 = vmatprep.subr.mxu0 0.0
    %243 = vmatpush1.msra.mxu0 0.0
    %244 = vmatprep.subr.mxu0 0.0
    %245 = vmatpush1.msra.mxu0 0.0
    %246 = vmatprep.subr.mxu0 0.0
    %247 = vmatpush1.msra.mxu0 0.0
    %248 = vmatprep.subr.mxu0 0.0
    %249 = vmatpush1.msra.mxu0 0.0
    %250 = vmatprep.subr.mxu0 0.0
    %251 = vmatpush1.msra.mxu0 0.0
    %252 = vmatprep.subr.mxu0 0.0
    %253 = vmatpush1.msra.mxu0 0.0
    %254 = vmatprep.subr.mxu0 0.0
    %255 = vmatpush1.msra.mxu0 0.0
    %256 = vmatprep.subr.mxu0 0.0
    %257 = vmatpush1.msra.mxu0 0.0
    %258 = vmatprep.subr.mxu0 0.0
    %259 = vmatpush1.msra.mxu0 0.0
    %260 = vmatprep.subr.mxu0 0.0
    %261 = vmatpush1.msra.mxu0 0.0
    %262 = vmatprep.subr.mxu0 0.0
    %263 = vmatpush1.msra.mxu0 0.0
    %264 = vmatprep.subr.mxu0 0.0
    %265 = vmatpush1.msra.mxu0 0.0
    %266 = vmatprep.subr.mxu0 0.0
    %267 = vmatpush1.msra.mxu0 0.0
    %268 = vmatprep.subr.mxu0 0.0
    %269 = vmatpush1.msra.mxu0 0.0
    %270 = vmatprep.subr.mxu0 0.0
    %271 = vmatpush1.msra.mxu0 0.0
    %272 = vmatprep.subr.mxu0 0.0
    %273 = vmatpush1.msra.mxu0 0.0
    %274 = vmatprep.subr.mxu0 0.0
    %275 = vmatpush1.msra.mxu0 0.0
    %276 = vmatprep.subr.mxu0 0.0
    %277 = vmatpush1.msra.mxu0 0.0
    %278 = vmatprep.subr.mxu0 0.0
    %279 = vmatpush1.msra.mxu0 0.0
    %280 = vmatprep.subr.mxu0 0.0
    %281 = vmatpush1.msra.mxu0 0.0
    %282 = vmatprep.subr.mxu0 0.0
    %283 = vmatpush1.msra.mxu0 0.0
    %284 = vmatprep.subr.mxu0 0.0
    %285 = vmatpush1.msra.mxu0 0.0
    %286 = vmatprep.subr.mxu0 0.0
    %287 = vmatpush1.msra.mxu0 0.0
    %288 = vmatprep.subr.mxu0 0.0
    %289 = vmatpush1.msra.mxu0 0.0
    %290 = vmatprep.subr.mxu0 0.0
    %291 = vmatpush1.msra.mxu0 0.0
    %292 = vmatprep.subr.mxu0 0.0
    %293 = vmatpush1.msra.mxu0 0.0
    %294 = vmatprep.subr.mxu0 0.0
    %295 = vmatpush1.msra.mxu0 0.0
    %296 = vmatprep.subr.mxu0 0.0
    %297 = vmatpush1.msra.mxu0 0.0
    %298 = vmatprep.mubr.f32.mxu0 0.0
    %299 = vmatmul.mubr.f32.gmra.mrb[0].mxu0 %v232
    %v300 = vpop.f32.mrb[0].mxu0
    %v301 = vadd.f32 0.0, %v300
    %v302 = vpop.f32.mrb[0].mxu0
    %303 = vdwg.mxu0
    %v304 = vld [vmem:[#allocation2] sm:$0x1]
    %306 = vset.pattern.permute.xlu0 0
    %307 = vperm.xlu0 %306, %v304
    %v308 = vpop.permute.xlu0 %307
    %v310 = vlaneseq
    %v311 = vshrl.u32 %v310, 7
    %v312 = vsub.s32 0, %v311
    %v313 = vrot.slane %v308, %v312
    %v314 = vadd.f32 %v301, %v313
    %v315 = vmul.f32 %v314, 0.5
    %v316 = vtanh.pop %v315
    %v317 = vadd.f32 %v316, 1.0
    %v318 = vmul.f32 %v317, 0.5
    %319 = vst [vmem:[#allocation3] sm:$0x1] %v318
    // Predicated region
    $region30: #{tpu_custom_call.1} parent=1 // pred_check
      _
    $region31: #{tpu_custom_call.1} parent=1 // pred_check_branch
      %321 = sbr.rel (0) target = $region33
    $region32: #{tpu_custom_call.1} parent=1 // pred_region
      %s323 = ssub.s32 16, 16
      %324 = vsyncadd [#allocation4], %s323
      %s326 = sshll.u32 [#allocation3], 4
      %s327 = int_to_ptr.vmem [resolvable:$true] %s326
      %329 = dma.vmem_to_hbm [thread:$0]  %s327, 16, %s7, [#allocation4]
    $region33: #{tpu_custom_call.1} parent=1 // pred_fallthru
      _
    // Predicated region
    $region34: #{tpu_custom_call.1} parent=1 // pred_check
      _
    $region35: #{tpu_custom_call.1} parent=1 // pred_check_branch
      %331 = sbr.rel (0) target = $region37
    $region36: #{tpu_custom_call.1} parent=1 // pred_region
      %332 = dma.done [#allocation4], 16
    $region37: #{tpu_custom_call.1} parent=1 // pred_fallthru
      _
    %333 = vsyncpa [#allocation4], 1

</llo_original>
